<compile_context>
chip_gen: v5e
topology: v5e:2x2
jax: 0.10.0
libtpu: 0.0.40
codegen_flags: <defaults>
</compile_context>

<pallas_src>
import jax
import jax.numpy as jnp
from jax.experimental import pallas as pl
from jax.experimental.pallas import tpu as pltpu


def _round_up(x, m):
    return ((x + m - 1) // m) * m


def _make_bottleneck_kernel(num_inputs):
    """Kernel refs: [x_0, bn_0, w_0, ..., x_{k-1}, bn_{k-1}, w_{k-1}, o_ref].

    x_i:  (C_i, thw)   NCHW-native activation tile (batch dim squeezed)
    bn_i: (2, C_i, 1)  row 0 = BN scale, row 1 = BN shift (eval-mode affine)
    w_i:  (Cout, C_i)  slice of the 1x1 conv weight for this input's channels
    o:    (Cout, thw)  output tile (already NCHW-native, no transpose needed)
    """

    def kernel(*refs):
        o_ref = refs[-1]
        acc = None
        for i in range(num_inputs):
            x_ref = refs[3 * i]
            bn_ref = refs[3 * i + 1]
            w_ref = refs[3 * i + 2]

            x = x_ref[...].astype(jnp.float32)            # (C_i, thw)
            scale = bn_ref[0].astype(jnp.float32)         # (C_i, 1)
            shift = bn_ref[1].astype(jnp.float32)         # (C_i, 1)
            xr = jnp.maximum(x * scale + shift, 0.0)      # BN + ReLU (f32, VPU)

            part = jnp.dot(                                # 1x1 conv slice (MXU)
                w_ref[...],
                xr.astype(w_ref.dtype),
                preferred_element_type=jnp.float32,
            )                                              # (Cout, thw), f32 acc
            acc = part if acc is None else acc + part
        o_ref[...] = acc.astype(o_ref.dtype)

    return kernel


def bottleneck_forward(inputs, gamma, beta, running_mean, running_var, conv_w,
                       eps=1e-5, thw=None):
    """inputs: list of NCHW arrays; conv_w: (Cout, Cin, 1, 1) PyTorch-layout weight."""
    N, _, H, W = inputs[0].shape
    c_list = [int(x.shape[1]) for x in inputs]
    Cin = sum(c_list)
    Cout = int(conv_w.shape[0])
    HW = H * W
    dtype = inputs[0].dtype
    itemsize = jnp.dtype(dtype).itemsize

    # BatchNorm eval-mode affine params (per channel over the concatenated axis).
    scale = (gamma / jnp.sqrt(running_var + eps)).astype(jnp.float32)   # (Cin,)
    shift = (beta - running_mean * scale).astype(jnp.float32)           # (Cin,)

    w_full = conv_w[:, :, 0, 0].astype(dtype)                           # (Cout, Cin)

    # Spatial (lane) tile: large and 128-aligned; shrink until the double-buffered
    # working set fits comfortably inside the default scoped VMEM (fits all of
    # v5e / v6e / v7x without raising the limit for typical DenseNet sizes).
    if thw is None:
        thw = min(2048, _round_up(HW, 128))
        while thw > 256:
            footprint = 2 * Cin * thw * itemsize + 2 * Cout * thw * itemsize
            if footprint <= 24 * 1024 * 1024:
                break
            thw //= 2
    HW_pad = _round_up(HW, thw)   # ragged spatial extent handled by zero-padding

    # Build per-input operands: NCHW -> (N, C_i, H*W) is a free reshape; the channel
    # concat is fused into per-slice matmuls inside the kernel.
    operands = []
    in_specs = []
    off = 0
    for x, c in zip(inputs, c_list):
        xf = x.reshape(N, c, HW)
        if HW_pad != HW:
            xf = jnp.pad(xf, ((0, 0), (0, 0), (0, HW_pad - HW)))
        bn_i = jnp.stack([scale[off:off + c], shift[off:off + c]]).reshape(2, c, 1)
        w_i = w_full[:, off:off + c]                                     # (Cout, C_i)
        operands += [xf, bn_i, w_i]
        in_specs += [
            pl.BlockSpec((None, c, thw), lambda n, j: (n, 0, j)),
            pl.BlockSpec((2, c, 1), lambda n, j: (0, 0, 0)),
            pl.BlockSpec((Cout, c), lambda n, j: (0, 0)),
        ]
        off += c

    grid = (N, HW_pad // thw)

    # Only raise the scoped-VMEM limit when the estimated footprint needs it; keep a
    # conservative cap so the request is valid on v7x's 64 MiB VMEM as well.
    est = (2 * Cin * thw * itemsize          # double-buffered activation tiles
           + 2 * Cout * thw * itemsize       # double-buffered output tiles
           + Cout * Cin * itemsize           # resident weight
           + 8 * Cin)                        # resident BN params
    compiler_kwargs = dict(dimension_semantics=("parallel", "parallel"))
    if est > 24 * 1024 * 1024:
        compiler_kwargs["vmem_limit_bytes"] = min(int(est * 1.5), 48 * 1024 * 1024)

    out_flat = pl.pallas_call(
        _make_bottleneck_kernel(len(inputs)),
        out_shape=jax.ShapeDtypeStruct((N, Cout, HW_pad), dtype),
        grid_spec=pltpu.PrefetchScalarGridSpec(
            num_scalar_prefetch=0,
            grid=grid,
            in_specs=in_specs,
            out_specs=pl.BlockSpec((None, Cout, thw), lambda n, j: (n, 0, j)),
        ),
        compiler_params=pltpu.CompilerParams(**compiler_kwargs),
    )(*operands)

    # (N, Cout, HW_pad) -> drop spatial padding -> NCHW (free reshape).
    out = out_flat[:, :, :HW].reshape(N, Cout, H, W)
    return out


if __name__ == "__main__":
    # Small shapes: two inputs of (2, 4, 16, 16) -> inchannel = 8
    # growthrate = 4, bn_size = 2 -> innerchannel (Cout) = 8
    key = jax.random.PRNGKey(0)
    k1, k2, k3, k4, k5, k6, k7 = jax.random.split(key, 7)

    N, C_each, H, W = 2, 4, 16, 16
    growthrate, bn_size = 4, 2
    Cin = 2 * C_each
    Cout = growthrate * bn_size

    x_a = jax.random.normal(k1, (N, C_each, H, W), dtype=jnp.float32)
    x_b = jax.random.normal(k2, (N, C_each, H, W), dtype=jnp.float32)

    # Deterministic synthetic parameters (BatchNorm2d + Conv2d 1x1, bias=False).
    gamma = 1.0 + 0.1 * jax.random.normal(k3, (Cin,), dtype=jnp.float32)
    beta = 0.1 * jax.random.normal(k4, (Cin,), dtype=jnp.float32)
    running_mean = 0.1 * jax.random.normal(k5, (Cin,), dtype=jnp.float32)
    running_var = jnp.abs(1.0 + 0.1 * jax.random.normal(k6, (Cin,), dtype=jnp.float32))
    conv_w = jax.random.normal(k7, (Cout, Cin, 1, 1), dtype=jnp.float32) * 0.1

    out = bottleneck_forward([x_a, x_b], gamma, beta, running_mean, running_var, conv_w)
    out = jax.block_until_ready(out)

    # Pure-JAX reference check (BN eval mode, concat semantics).
    xc = jnp.concatenate([x_a, x_b], axis=1)
    scale = gamma / jnp.sqrt(running_var + 1e-5)
    shift = beta - running_mean * scale
    xn = xc * scale[None, :, None, None] + shift[None, :, None, None]
    xr = jnp.maximum(xn, 0.0)
    ref = jnp.einsum("nchw,oc->nohw", xr, conv_w[:, :, 0, 0])
    assert out.shape == (N, Cout, H, W)
    assert jnp.allclose(out, ref, atol=1e-4, rtol=1e-4)

    print("KERNEL_OK")
</pallas_src>

<mosaic_0001>
module attributes {stable_mosaic.version = 11 : i64} {
  func.func @kernel(%arg0: i32, %arg1: i32, %arg2: memref<1x4x256xf32, #tpu.memory_space<vmem>>, %arg3: memref<2x4x1xf32, #tpu.memory_space<vmem>>, %arg4: memref<8x4xf32, #tpu.memory_space<vmem>>, %arg5: memref<1x4x256xf32, #tpu.memory_space<vmem>>, %arg6: memref<2x4x1xf32, #tpu.memory_space<vmem>>, %arg7: memref<8x4xf32, #tpu.memory_space<vmem>>, %arg8: memref<1x8x256xf32, #tpu.memory_space<vmem>>) attributes {dimension_semantics = [#tpu.dimension_semantics<parallel>, #tpu.dimension_semantics<parallel>], iteration_bounds = array<i64: 2, 1>, scalar_prefetch = 0 : i64, scratch_operands = 0 : i64, tpu.core_type = #tpu.core_type<tc>, window_params = [{transform_indices = @transform_0, window_bounds = array<i64: 1, 4, 256>}, {pipeline_mode = #tpu.pipeline_mode<synchronous>, transform_indices = @transform_1, window_bounds = array<i64: 2, 4, 1>}, {pipeline_mode = #tpu.pipeline_mode<synchronous>, transform_indices = @transform_2, window_bounds = array<i64: 8, 4>}, {transform_indices = @transform_3, window_bounds = array<i64: 1, 4, 256>}, {pipeline_mode = #tpu.pipeline_mode<synchronous>, transform_indices = @transform_4, window_bounds = array<i64: 2, 4, 1>}, {pipeline_mode = #tpu.pipeline_mode<synchronous>, transform_indices = @transform_5, window_bounds = array<i64: 8, 4>}, {transform_indices = @transform_6, window_bounds = array<i64: 1, 8, 256>}]} {
    %c0 = arith.constant 0 : index
    %c0_0 = arith.constant 0 : index
    %c0_1 = arith.constant 0 : index
    %0 = vector.load %arg2[%c0, %c0_0, %c0_1] : memref<1x4x256xf32, #tpu.memory_space<vmem>>, vector<1x4x256xf32>
    %1 = vector.shape_cast %0 : vector<1x4x256xf32> to vector<4x256xf32>
    %c0_2 = arith.constant 0 : index
    %c0_3 = arith.constant 0 : index
    %c0_4 = arith.constant 0 : index
    %2 = vector.load %arg3[%c0_2, %c0_3, %c0_4] : memref<2x4x1xf32, #tpu.memory_space<vmem>>, vector<1x4x1xf32>
    %3 = vector.shape_cast %2 : vector<1x4x1xf32> to vector<4x1xf32>
    %c1 = arith.constant 1 : index
    %c0_5 = arith.constant 0 : index
    %c0_6 = arith.constant 0 : index
    %4 = vector.load %arg3[%c1, %c0_5, %c0_6] : memref<2x4x1xf32, #tpu.memory_space<vmem>>, vector<1x4x1xf32>
    %5 = vector.shape_cast %4 : vector<1x4x1xf32> to vector<4x1xf32>
    %6 = vector.broadcast %3 : vector<4x1xf32> to vector<4x256xf32>
    %7 = arith.mulf %1, %6 : vector<4x256xf32>
    %8 = vector.broadcast %5 : vector<4x1xf32> to vector<4x256xf32>
    %9 = arith.addf %7, %8 : vector<4x256xf32>
    %cst = arith.constant 0.000000e+00 : f32
    %10 = vector.broadcast %cst : f32 to vector<4x256xf32>
    %11 = arith.maximumf %9, %10 : vector<4x256xf32>
    %c0_7 = arith.constant 0 : index
    %c0_8 = arith.constant 0 : index
    %12 = vector.load %arg4[%c0_7, %c0_8] : memref<8x4xf32, #tpu.memory_space<vmem>>, vector<8x4xf32>
    %cst_9 = arith.constant dense<0.000000e+00> : vector<8x256xf32>
    %13 = tpu.matmul %12, %11, %cst_9 {dimension_numbers = #tpu.dot_dimension_numbers<[1], [0], [0], [1], [0, 0, 1, 1], [], []>} : vector<8x4xf32>, vector<4x256xf32>, vector<8x256xf32> -> vector<8x256xf32>
    %c0_10 = arith.constant 0 : index
    %c0_11 = arith.constant 0 : index
    %c0_12 = arith.constant 0 : index
    %14 = vector.load %arg5[%c0_10, %c0_11, %c0_12] : memref<1x4x256xf32, #tpu.memory_space<vmem>>, vector<1x4x256xf32>
    %15 = vector.shape_cast %14 : vector<1x4x256xf32> to vector<4x256xf32>
    %c0_13 = arith.constant 0 : index
    %c0_14 = arith.constant 0 : index
    %c0_15 = arith.constant 0 : index
    %16 = vector.load %arg6[%c0_13, %c0_14, %c0_15] : memref<2x4x1xf32, #tpu.memory_space<vmem>>, vector<1x4x1xf32>
    %17 = vector.shape_cast %16 : vector<1x4x1xf32> to vector<4x1xf32>
    %c1_16 = arith.constant 1 : index
    %c0_17 = arith.constant 0 : index
    %c0_18 = arith.constant 0 : index
    %18 = vector.load %arg6[%c1_16, %c0_17, %c0_18] : memref<2x4x1xf32, #tpu.memory_space<vmem>>, vector<1x4x1xf32>
    %19 = vector.shape_cast %18 : vector<1x4x1xf32> to vector<4x1xf32>
    %20 = vector.broadcast %17 : vector<4x1xf32> to vector<4x256xf32>
    %21 = arith.mulf %15, %20 : vector<4x256xf32>
    %22 = vector.broadcast %19 : vector<4x1xf32> to vector<4x256xf32>
    %23 = arith.addf %21, %22 : vector<4x256xf32>
    %cst_19 = arith.constant 0.000000e+00 : f32
    %24 = vector.broadcast %cst_19 : f32 to vector<4x256xf32>
    %25 = arith.maximumf %23, %24 : vector<4x256xf32>
    %c0_20 = arith.constant 0 : index
    %c0_21 = arith.constant 0 : index
    %26 = vector.load %arg7[%c0_20, %c0_21] : memref<8x4xf32, #tpu.memory_space<vmem>>, vector<8x4xf32>
    %cst_22 = arith.constant dense<0.000000e+00> : vector<8x256xf32>
    %27 = tpu.matmul %26, %25, %cst_22 {dimension_numbers = #tpu.dot_dimension_numbers<[1], [0], [0], [1], [0, 0, 1, 1], [], []>} : vector<8x4xf32>, vector<4x256xf32>, vector<8x256xf32> -> vector<8x256xf32>
    %28 = arith.addf %13, %27 : vector<8x256xf32>
    %c0_23 = arith.constant 0 : index
    %c0_24 = arith.constant 0 : index
    %c0_25 = arith.constant 0 : index
    %29 = vector.load %arg8[%c0_23, %c0_24, %c0_25] : memref<1x8x256xf32, #tpu.memory_space<vmem>>, vector<1x8x256xf32>
    %30 = vector.shape_cast %29 : vector<1x8x256xf32> to vector<8x256xf32>
    %31 = vector.shape_cast %28 : vector<8x256xf32> to vector<1x8x256xf32>
    tpu.vector_store %arg8[%c0_23, %c0_24, %c0_25], %31 {strides = array<i32>} : memref<1x8x256xf32, #tpu.memory_space<vmem>>, vector<1x8x256xf32>,
    return
  }
  func.func @transform_0(%arg0: i32, %arg1: i32) -> (i32, i32, i32) {
    %c0_i32 = arith.constant 0 : i32
    %c0_i32_0 = arith.constant 0 : i32
    return %arg0, %c0_i32, %arg1 : i32, i32, i32
  }
  func.func @transform_1(%arg0: i32, %arg1: i32) -> (i32, i32, i32) {
    %c0_i32 = arith.constant 0 : i32
    %c0_i32_0 = arith.constant 0 : i32
    %c0_i32_1 = arith.constant 0 : i32
    %c0_i32_2 = arith.constant 0 : i32
    return %c0_i32, %c0_i32_0, %c0_i32_1 : i32, i32, i32
  }
  func.func @transform_2(%arg0: i32, %arg1: i32) -> (i32, i32) {
    %c0_i32 = arith.constant 0 : i32
    %c0_i32_0 = arith.constant 0 : i32
    %c0_i32_1 = arith.constant 0 : i32
    return %c0_i32, %c0_i32_0 : i32, i32
  }
  func.func @transform_3(%arg0: i32, %arg1: i32) -> (i32, i32, i32) {
    %c0_i32 = arith.constant 0 : i32
    %c0_i32_0 = arith.constant 0 : i32
    return %arg0, %c0_i32, %arg1 : i32, i32, i32
  }
  func.func @transform_4(%arg0: i32, %arg1: i32) -> (i32, i32, i32) {
    %c0_i32 = arith.constant 0 : i32
    %c0_i32_0 = arith.constant 0 : i32
    %c0_i32_1 = arith.constant 0 : i32
    %c0_i32_2 = arith.constant 0 : i32
    return %c0_i32, %c0_i32_0, %c0_i32_1 : i32, i32, i32
  }
  func.func @transform_5(%arg0: i32, %arg1: i32) -> (i32, i32) {
    %c0_i32 = arith.constant 0 : i32
    %c0_i32_0 = arith.constant 0 : i32
    %c0_i32_1 = arith.constant 0 : i32
    return %c0_i32, %c0_i32_0 : i32, i32
  }
  func.func @transform_6(%arg0: i32, %arg1: i32) -> (i32, i32, i32) {
    %c0_i32 = arith.constant 0 : i32
    %c0_i32_0 = arith.constant 0 : i32
    return %arg0, %c0_i32, %arg1 : i32, i32, i32
  }
}

</mosaic_0001>

<llo_original>
// kernel: tpu_custom_call.1
$region0: #{tpu_custom_call.1}
  #allocation0 [shape = 'u32[]', space=smem, size = 0x4, offset = 0x4, fixed_abs, tag = 'smem constant byte address 0x4 - core index']
  #allocation1 [shape = 'u32[72,128]{1,0:T(1,128)}', space=vmem, size = 0x9000, scoped, tag = 'internal scratch']
  %s0 = inlined_call_operand.vmem [shape: f32[2,4,256], index: 0, kind: input, shape index: {}]
  %s1 = inlined_call_operand.vmem [shape: f32[2,4,1], index: 1, kind: input, shape index: {}]
  %s2 = inlined_call_operand.vmem [shape: f32[8,4], index: 2, kind: input, shape index: {}]
  %s3 = inlined_call_operand.hbm [shape: f32[2,4,256], index: 3, kind: input, shape index: {}]
  %s4 = inlined_call_operand.vmem [shape: f32[2,4,1], index: 4, kind: input, shape index: {}]
  %s5 = inlined_call_operand.vmem [shape: f32[8,4], index: 5, kind: input, shape index: {}]
  %s6 = inlined_call_operand.hbm [shape: f32[2,8,256], index: 6, kind: output, shape index: {}]
  %s7 = sld [smem:[#allocation0]]
  $region61: #{tpu_custom_call.1} parent=0
    _
  %s9 = ssub.s32 1, %s7
  %s10 = scalar_select 0, %s9, %s7
  $region1: #{tpu_custom_call.1} parent=0
    #allocation2 [shape = 'u8[8192]{0}', space=vmem, size = 0x2000, scoped, tag = 'input window, operand 3']
    #allocation3 [shape = 's32[2]{0}', space=sflag, size = 0x8, scoped, tag = 'scoped memory for tpu_custom_call.1']
    #allocation4 [shape = 's32[2]{0}', space=sflag, size = 0x8, scoped, tag = 'scoped memory for tpu_custom_call.1']
    #allocation5 [shape = 'u8[16384]{0}', space=vmem, size = 0x4000, scoped, tag = 'output window, operand 0']
    %11 = vsyncpa [#allocation3], 0
    %s12 = scalar_lea.sflag [#allocation3], 1
    %13 = vsyncpa %s12, 0
    %14 = vsyncpa [#allocation4], 0
    %s15 = scalar_lea.sflag [#allocation4], 1
    %16 = vsyncpa %s15, 0
    loop: start=0, step=1, limit=4
    $region2: #{tpu_custom_call.1} parent=1 // loop_pre_header
      _
    $region3: #{tpu_custom_call.1} parent=1 // loop_header
      %s18 = sphi 0, %s22
      %p19 = scmp.ge.s32.totalorder %s18, 4
      %s25 = sphi 0, %s37
      %s26 = sphi 0, %s33
      %s27 = sphi 0, %s25
      %s28 = sphi 0, %s26
      %s29 = sphi 0, %s27
      %s30 = sphi 0, %s28
      %s42 = sphi 0, %s44
      %s45 = sphi 0, %s42
      %s46 = sphi 0, %s45
      %s62 = sphi 0, %s46
      %s66 = sphi 0, %s66
      %s68 = sphi 0, %s66
      %s69 = sphi 0, %s68
      %s83 = sphi 0, %s69
      %s87 = sphi 0, %s87
      %s89 = sphi 0, %s87
      %s90 = sphi 0, %s89
      %s104 = sphi 0, %s90
      %s112 = sphi 0, %s114
      %s115 = sphi 0, %s112
      %s116 = sphi 0, %s115
      %s132 = sphi 0, %s116
      %s136 = sphi 0, %s136
      %s138 = sphi 0, %s136
      %s139 = sphi 0, %s138
      %s153 = sphi 0, %s139
      %s157 = sphi 0, %s157
      %s159 = sphi 0, %s157
      %s160 = sphi 0, %s159
      %s174 = sphi 0, %s160
      %s182 = sphi 0, %s184
      %s185 = sphi 0, %s182
      %s186 = sphi 0, %s185
      %s202 = sphi 0, %s186
    $region4: #{tpu_custom_call.1} parent=1 // loop_header_branch
      %21 = sbr.rel (%p19) target = $region8
    $region5: #{tpu_custom_call.1} parent=1 // loop_body
      %s23 = ssub.s32 %s18, 1
      %s24 = ssub.s32 %s18, 2
      %s31 = sadd.s32 1, %s26
      %p32 = scmp.ge.s32.totalorder %s31, 1
      %s33 = scalar_select %p32, 0, %s31
      %s34 = sadd.s32 1, %s25
      %s35 = scalar_select %p32, %s34, %s25
      %p36 = scmp.ge.s32.totalorder %s35, 2
      %s37 = scalar_select %p36, 0, %s35
      %s38 = ssub.s32 %s25, %s37
      %s39 = ssub.s32 %s26, %s33
      %s40 = sor.u32 %s38, %s39
      %p41 = scmp.eq.s32.totalorder %s40, 0
      %s43 = sadd.s32 %s42, 1
      %s44 = scalar_select %p41, %s42, %s43
      %p47 = pneg %p41
      %p48 = scmp.eq.s32.totalorder %s18, 1
      %p49 = por %p47, %p48
      %p50 = scmp.ne.s32.totalorder %s42, %s45
      %p51 = scmp.eq.s32.totalorder %s18, 0
      %p52 = por %p50, %p51
      %p53 = scmp.ne.s32.totalorder %s42, %s45
      %p54 = scmp.eq.s32.totalorder %s23, 1
      %p55 = por %p53, %p54
      %p56 = scmp.ne.s32.totalorder %s45, %s46
      %p57 = scmp.eq.s32.totalorder %s23, 0
      %p58 = por %p56, %p57
      %p59 = scmp.ne.s32.totalorder %s45, %s46
      %p60 = scmp.eq.s32.totalorder %s24, 1
      %p61 = por %p59, %p60
      %p63 = scmp.ne.s32.totalorder %s46, %s62
      %p64 = scmp.eq.s32.totalorder %s24, 0
      %p65 = por %p63, %p64
      %s67 = sadd.s32 %s66, 1
      %p70 = scmp.eq.s32.totalorder %s18, 1
      %p71 = scmp.ne.s32.totalorder %s66, %s68
      %p72 = scmp.eq.s32.totalorder %s18, 0
      %p73 = por %p71, %p72
      %p74 = scmp.ne.s32.totalorder %s66, %s68
      %p75 = scmp.eq.s32.totalorder %s23, 1
      %p76 = por %p74, %p75
      %p77 = scmp.ne.s32.totalorder %s68, %s69
      %p78 = scmp.eq.s32.totalorder %s23, 0
      %p79 = por %p77, %p78
      %p80 = scmp.ne.s32.totalorder %s68, %s69
      %p81 = scmp.eq.s32.totalorder %s24, 1
      %p82 = por %p80, %p81
      %p84 = scmp.ne.s32.totalorder %s69, %s83
      %p85 = scmp.eq.s32.totalorder %s24, 0
      %p86 = por %p84, %p85
      %s88 = sadd.s32 %s87, 1
      %p91 = scmp.eq.s32.totalorder %s18, 1
      %p92 = scmp.ne.s32.totalorder %s87, %s89
      %p93 = scmp.eq.s32.totalorder %s18, 0
      %p94 = por %p92, %p93
      %p95 = scmp.ne.s32.totalorder %s87, %s89
      %p96 = scmp.eq.s32.totalorder %s23, 1
      %p97 = por %p95, %p96
      %p98 = scmp.ne.s32.totalorder %s89, %s90
      %p99 = scmp.eq.s32.totalorder %s23, 0
      %p100 = por %p98, %p99
      %p101 = scmp.ne.s32.totalorder %s89, %s90
      %p102 = scmp.eq.s32.totalorder %s24, 1
      %p103 = por %p101, %p102
      %p105 = scmp.ne.s32.totalorder %s90, %s104
      %p106 = scmp.eq.s32.totalorder %s24, 0
      %p107 = por %p105, %p106
      %s108 = ssub.s32 %s25, %s37
      %s109 = ssub.s32 %s26, %s33
      %s110 = sor.u32 %s108, %s109
      %p111 = scmp.eq.s32.totalorder %s110, 0
      %s113 = sadd.s32 %s112, 1
      %s114 = scalar_select %p111, %s112, %s113
      %p117 = pneg %p111
      %p118 = scmp.eq.s32.totalorder %s18, 1
      %p119 = por %p117, %p118
      %p120 = scmp.ne.s32.totalorder %s112, %s115
      %p121 = scmp.eq.s32.totalorder %s18, 0
      %p122 = por %p120, %p121
      %p123 = scmp.ne.s32.totalorder %s112, %s115
      %p124 = scmp.eq.s32.totalorder %s23, 1
      %p125 = por %p123, %p124
      %p126 = scmp.ne.s32.totalorder %s115, %s116
      %p127 = scmp.eq.s32.totalorder %s23, 0
      %p128 = por %p126, %p127
      %p129 = scmp.ne.s32.totalorder %s115, %s116
      %p130 = scmp.eq.s32.totalorder %s24, 1
      %p131 = por %p129, %p130
      %p133 = scmp.ne.s32.totalorder %s116, %s132
      %p134 = scmp.eq.s32.totalorder %s24, 0
      %p135 = por %p133, %p134
      %s137 = sadd.s32 %s136, 1
      %p140 = scmp.eq.s32.totalorder %s18, 1
      %p141 = scmp.ne.s32.totalorder %s136, %s138
      %p142 = scmp.eq.s32.totalorder %s18, 0
      %p143 = por %p141, %p142
      %p144 = scmp.ne.s32.totalorder %s136, %s138
      %p145 = scmp.eq.s32.totalorder %s23, 1
      %p146 = por %p144, %p145
      %p147 = scmp.ne.s32.totalorder %s138, %s139
      %p148 = scmp.eq.s32.totalorder %s23, 0
      %p149 = por %p147, %p148
      %p150 = scmp.ne.s32.totalorder %s138, %s139
      %p151 = scmp.eq.s32.totalorder %s24, 1
      %p152 = por %p150, %p151
      %p154 = scmp.ne.s32.totalorder %s139, %s153
      %p155 = scmp.eq.s32.totalorder %s24, 0
      %p156 = por %p154, %p155
      %s158 = sadd.s32 %s157, 1
      %p161 = scmp.eq.s32.totalorder %s18, 1
      %p162 = scmp.ne.s32.totalorder %s157, %s159
      %p163 = scmp.eq.s32.totalorder %s18, 0
      %p164 = por %p162, %p163
      %p165 = scmp.ne.s32.totalorder %s157, %s159
      %p166 = scmp.eq.s32.totalorder %s23, 1
      %p167 = por %p165, %p166
      %p168 = scmp.ne.s32.totalorder %s159, %s160
      %p169 = scmp.eq.s32.totalorder %s23, 0
      %p170 = por %p168, %p169
      %p171 = scmp.ne.s32.totalorder %s159, %s160
      %p172 = scmp.eq.s32.totalorder %s24, 1
      %p173 = por %p171, %p172
      %p175 = scmp.ne.s32.totalorder %s160, %s174
      %p176 = scmp.eq.s32.totalorder %s24, 0
      %p177 = por %p175, %p176
      %s178 = ssub.s32 %s25, %s37
      %s179 = ssub.s32 %s26, %s33
      %s180 = sor.u32 %s178, %s179
      %p181 = scmp.eq.s32.totalorder %s180, 0
      %s183 = sadd.s32 %s182, 1
      %s184 = scalar_select %p181, %s182, %s183
      %p187 = pneg %p181
      %p188 = scmp.eq.s32.totalorder %s18, 1
      %p189 = por %p187, %p188
      %p190 = scmp.ne.s32.totalorder %s182, %s185
      %p191 = scmp.eq.s32.totalorder %s18, 0
      %p192 = por %p190, %p191
      %p193 = scmp.ne.s32.totalorder %s182, %s185
      %p194 = scmp.eq.s32.totalorder %s23, 1
      %p195 = por %p193, %p194
      %p196 = scmp.ne.s32.totalorder %s185, %s186
      %p197 = scmp.eq.s32.totalorder %s23, 0
      %p198 = por %p196, %p197
      %p199 = scmp.ne.s32.totalorder %s185, %s186
      %p200 = scmp.eq.s32.totalorder %s24, 1
      %p201 = por %p199, %p200
      %p203 = scmp.ne.s32.totalorder %s186, %s202
      %p204 = scmp.eq.s32.totalorder %s24, 0
      %p205 = por %p203, %p204
      %p206 = scmp.le.s32.totalorder 1, %s18
      %p207 = scmp.lt.s32.totalorder %s18, 3
      %p208 = pnand %p206, %p207
      %p209 = pneg %p208
      // Predicated region
      $region9: #{tpu_custom_call.1} parent=5 // pred_check
        _
      $region10: #{tpu_custom_call.1} parent=5 // pred_check_branch
        %211 = sbr.rel (%p208) target = $region12
      $region11: #{tpu_custom_call.1} parent=5 // pred_region
        %s212 = ssub.s32 %s18, 1
        // Predicated region
        $region13: #{tpu_custom_call.1} parent=11 // pred_check
          %p213 = pneg %p79
        $region14: #{tpu_custom_call.1} parent=11 // pred_check_branch
          %215 = sbr.rel (%p213) target = $region16
        $region15: #{tpu_custom_call.1} parent=11 // pred_region
          _
        $region16: #{tpu_custom_call.1} parent=11 // pred_fallthru
          _
        // Predicated region
        $region17: #{tpu_custom_call.1} parent=11 // pred_check
          %p216 = pneg %p100
        $region18: #{tpu_custom_call.1} parent=11 // pred_check_branch
          %218 = sbr.rel (%p216) target = $region20
        $region19: #{tpu_custom_call.1} parent=11 // pred_region
          _
        $region20: #{tpu_custom_call.1} parent=11 // pred_fallthru
          _
        // Predicated region
        $region21: #{tpu_custom_call.1} parent=11 // pred_check
          %p219 = pneg %p149
        $region22: #{tpu_custom_call.1} parent=11 // pred_check_branch
          %221 = sbr.rel (%p219) target = $region24
        $region23: #{tpu_custom_call.1} parent=11 // pred_region
          _
        $region24: #{tpu_custom_call.1} parent=11 // pred_fallthru
          _
        // Predicated region
        $region25: #{tpu_custom_call.1} parent=11 // pred_check
          %p222 = pneg %p170
        $region26: #{tpu_custom_call.1} parent=11 // pred_check_branch
          %224 = sbr.rel (%p222) target = $region28
        $region27: #{tpu_custom_call.1} parent=11 // pred_region
          _
        $region28: #{tpu_custom_call.1} parent=11 // pred_fallthru
          _
      $region12: #{tpu_custom_call.1} parent=5 // pred_fallthru
        _
      %p225 = scmp.lt.s32.totalorder %s18, 2
      // Predicated region
      $region29: #{tpu_custom_call.1} parent=5 // pred_check
        %p226 = pneg %p225
      $region30: #{tpu_custom_call.1} parent=5 // pred_check_branch
        %228 = sbr.rel (%p226) target = $region32
      $region31: #{tpu_custom_call.1} parent=5 // pred_region
        // Predicated region
        $region33: #{tpu_custom_call.1} parent=31 // pred_check
          %p229 = pneg %p52
        $region34: #{tpu_custom_call.1} parent=31 // pred_check_branch
          %231 = sbr.rel (%p229) target = $region36
        $region35: #{tpu_custom_call.1} parent=31 // pred_region
          %s232 = smul.u32 2, %s26
          %p233 = scmp.lt.s32.totalorder %s25, 1
          %s234 = scalar_select %p233, %s25, 1
          %p235 = scmp.lt.s32.totalorder %s232, 1
          %s236 = scalar_select %p235, %s232, 1
          %s237 = smul.addr %s234, 2
          %s238 = sadd.s32 %s236, %s237
          %s239 = smul.addr %s238, 4
          %s240 = scalar_lea.vmem %s0, %s239
          %s241 = smul.u32 2, %s26
        $region36: #{tpu_custom_call.1} parent=31 // pred_fallthru
          _
        // Predicated region
        $region37: #{tpu_custom_call.1} parent=31 // pred_check
          %p242 = pneg %p122
        $region38: #{tpu_custom_call.1} parent=31 // pred_check_branch
          %244 = sbr.rel (%p242) target = $region40
        $region39: #{tpu_custom_call.1} parent=31 // pred_region
          %s245 = sand.u32 %s112, 1
          %s246 = scalar_lea.sflag [#allocation3], %s245
          %s247 = sand.u32 %s112, 1
          %s248 = smul.addr %s247, 8
          %s249 = scalar_lea.vmem [#allocation2], %s248
          %s250 = smul.u32 2, %s26
          %252 = vsyncadd %s246, 0
          %s253 = smul.addr %s25, 2
          %s254 = sadd.s32 %s250, %s253
          %s255 = smul.addr %s254, 4
          %s256 = scalar_lea.hbm %s3, %s255
          %s258 = sshll.u32 %s256, 4
          %s259 = int_to_ptr.hbm [resolvable:$true] %s258
          %s260 = sshll.u32 %s249, 4
          %s261 = int_to_ptr.vmem [resolvable:$true] %s260
          %263 = dma.hbm_to_vmem [thread:$0]  %s259, 128, %s261, %s246
        $region40: #{tpu_custom_call.1} parent=31 // pred_fallthru
          _
      $region32: #{tpu_custom_call.1} parent=5 // pred_fallthru
        _
      %p264 = scmp.le.s32.totalorder 1, %s18
      %p265 = scmp.lt.s32.totalorder %s18, 3
      %p266 = pnand %p264, %p265
      %p267 = pneg %p266
      // Predicated region
      $region41: #{tpu_custom_call.1} parent=5 // pred_check
        _
      $region42: #{tpu_custom_call.1} parent=5 // pred_check_branch
        %269 = sbr.rel (%p266) target = $region44
      $region43: #{tpu_custom_call.1} parent=5 // pred_region
        %s270 = ssub.s32 %s18, 1
        %s271 = sand.u32 %s115, 1
        %s272 = scalar_lea.sflag [#allocation3], %s271
        %s273 = sand.u32 %s115, 1
        %s274 = smul.addr %s273, 8
        %s275 = scalar_lea.vmem [#allocation2], %s274
        // Predicated region
        $region45: #{tpu_custom_call.1} parent=43 // pred_check
          %p276 = pneg %p128
        $region46: #{tpu_custom_call.1} parent=43 // pred_check_branch
          %278 = sbr.rel (%p276) target = $region48
        $region47: #{tpu_custom_call.1} parent=43 // pred_region
          %280 = dma.done %s272, 128
        $region48: #{tpu_custom_call.1} parent=43 // pred_fallthru
          _
        %s281 = smul.u32 2, %s28
        %p282 = scmp.lt.s32.totalorder %s27, 1
        %s283 = scalar_select %p282, %s27, 1
        %p284 = scmp.lt.s32.totalorder %s281, 1
        %s285 = scalar_select %p284, %s281, 1
        %s286 = smul.addr %s283, 2
        %s287 = sadd.s32 %s285, %s286
        %s288 = smul.addr %s287, 4
        %s289 = scalar_lea.vmem %s0, %s288
        %p290 = pneg %p58
        %p291 = pneg %p55
        %p292 = pneg %p79
        %p293 = pneg %p76
        %p294 = pneg %p100
        %p295 = pneg %p97
        %s296 = sand.u32 %s115, 1
        %s297 = scalar_lea.sflag [#allocation3], %s296
        %s298 = sand.u32 %s115, 1
        %s299 = smul.addr %s298, 8
        %s300 = scalar_lea.vmem [#allocation2], %s299
        %p301 = pneg %p128
        %p302 = pneg %p125
        %p303 = pneg %p149
        %p304 = pneg %p146
        %p305 = pneg %p170
        %p306 = pneg %p167
        %p307 = pneg %p198
        %p308 = pneg %p195
        %s309 = sand.u32 %s185, 1
        %s310 = scalar_lea.sflag [#allocation4], %s309
        %s311 = sand.u32 %s185, 1
        %s312 = smul.addr %s311, 16
        %s313 = scalar_lea.vmem [#allocation5], %s312
        %s314 = smul.u32 2, %s28
        %p315 = scmp.lt.s32.totalorder %s27, 1
        %s316 = scalar_select %p315, %s27, 1
        %p317 = scmp.lt.s32.totalorder %s314, 1
        %s318 = scalar_select %p317, %s314, 1
        %s319 = smul.addr %s316, 2
        %s320 = sadd.s32 %s318, %s319
        %s321 = smul.addr %s320, 4
        %s322 = scalar_lea.vmem %s0, %s321
        %s323 = smul.u32 2, %s28
        %s324 = smul.u32 2, %s28
        %s325 = smul.u32 2, %s28
        %v326 = vld [vmem:[%s322] sm:$0xff]
        %v327 = vld [vmem:[%s1] sm:$0xf]
        %s328 = scalar_lea.vmem %s1, 4
        %v329 = vld [vmem:[%s328] sm:$0xf]
        %331 = vset.pattern.permute.xlu0 0
        %332 = vperm.xlu0 %331, %v327
        %v333 = vpop.permute.xlu0 %332
        %v335 = vunpack.c.l.s4 839922192
        %v336 = vunpack.c.0.s8 %v335
        %v337 = vperm.slane %v333, %v336
        %v339 = vmul.f32 %v326, %v337
        %341 = vset.pattern.permute.xlu0 0
        %342 = vperm.xlu0 %341, %v329
        %v343 = vpop.permute.xlu0 %342
        %v345 = vunpack.c.l.s4 839922192
        %v346 = vunpack.c.0.s8 %v345
        %v347 = vperm.slane %v343, %v346
        %v349 = vadd.f32 %v339, %v347
        %v350 = vmax.f32 %v349, 0.0
        %v351 = vld [vmem:[%s2] sm:$0xff]
        %v352 = vld [vmem:[%s275] sm:$0xff]
        %v353 = vld [vmem:[%s4] sm:$0xf]
        %s354 = scalar_lea.vmem %s4, 4
        %v355 = vld [vmem:[%s354] sm:$0xf]
        %357 = vset.pattern.permute.xlu0 0
        %358 = vperm.xlu0 %357, %v353
        %v359 = vpop.permute.xlu0 %358
        %v361 = vunpack.c.l.s4 839922192
        %v362 = vunpack.c.0.s8 %v361
        %v363 = vperm.slane %v359, %v362
        %v365 = vmul.f32 %v352, %v363
        %367 = vset.pattern.permute.xlu0 0
        %368 = vperm.xlu0 %367, %v355
        %v369 = vpop.permute.xlu0 %368
        %v371 = vunpack.c.l.s4 839922192
        %v372 = vunpack.c.0.s8 %v371
        %v373 = vperm.slane %v369, %v372
        %v375 = vadd.f32 %v365, %v373
        %v376 = vmax.f32 %v375, 0.0
        %v377 = vld [vmem:[%s5] sm:$0xff]
        %379 = vst [vmem:[#allocation1] ss:$2 sm:$0xff] %v376
        %v380 = vld.sshfl [vmem:[#allocation1] sm:$0xff pattern:$0x75316420]
        %v381 = vld.sshfl [vmem:[#allocation1 + $0x8] sm:$0xff pattern:$0x75316420]
        %vm382 = vcmask 31744
        %v384 = vsel %vm382, %v377, 0
        %vm386 = vcmask 1043456
        %v387 = vsel %vm386, %v380, 0
        %v389 = vsel %vm386, %v381, 0
        %391 = vmatpush.msra.mxu0 0.0
        %392 = vmatpush.msra.mxu0 0.0
        %393 = vmatpush.msra.mxu0 0.0
        %394 = vmatpush.msra.mxu0 0.0
        %395 = vmatpush.msra.mxu0 0.0
        %396 = vmatpush.msra.mxu0 0.0
        %397 = vmatpush.msra.mxu0 0.0
        %398 = vmatpush.msra.mxu0 0.0
        %399 = vmatpush.msra.mxu0 0.0
        %400 = vmatpush.msra.mxu0 0.0
        %401 = vmatpush.msra.mxu0 0.0
        %402 = vmatpush.msra.mxu0 0.0
        %403 = vmatpush.msra.mxu0 0.0
        %404 = vmatpush.msra.mxu0 0.0
        %405 = vmatpush.msra.mxu0 0.0
        %406 = vmatpush.msra.mxu0 %v387
        %407 = vmatmul.f32.gmra.mxu0 %v384
        %v408 = vpop.f32.mrf.mxu0
        %v409 = vadd.f32 0.0, %v408
        %410 = vdwg.mxu0
        %411 = vmatpush.msra.mxu0 0.0
        %412 = vmatpush.msra.mxu0 0.0
        %413 = vmatpush.msra.mxu0 0.0
        %414 = vmatpush.msra.mxu0 0.0
        %415 = vmatpush.msra.mxu0 0.0
        %416 = vmatpush.msra.mxu0 0.0
        %417 = vmatpush.msra.mxu0 0.0
        %418 = vmatpush.msra.mxu0 0.0
        %419 = vmatpush.msra.mxu0 0.0
        %420 = vmatpush.msra.mxu0 0.0
        %421 = vmatpush.msra.mxu0 0.0
        %422 = vmatpush.msra.mxu0 0.0
        %423 = vmatpush.msra.mxu0 0.0
        %424 = vmatpush.msra.mxu0 0.0
        %425 = vmatpush.msra.mxu0 0.0
        %426 = vmatpush.msra.mxu0 %v389
        %427 = vmatmul.f32.gmra.mxu0 %v384
        %v428 = vpop.f32.mrf.mxu0
        %v429 = vadd.f32 0.0, %v428
        %430 = vdwg.mxu0
        %432 = vst [vmem:[#allocation1] ss:$2 sm:$0xff] %v350
        %v433 = vld.sshfl [vmem:[#allocation1] sm:$0xff pattern:$0x75316420]
        %v434 = vld.sshfl [vmem:[#allocation1 + $0x8] sm:$0xff pattern:$0x75316420]
        %v436 = vsel %vm382, %v351, 0
        %v438 = vsel %vm386, %v433, 0
        %v440 = vsel %vm386, %v434, 0
        %442 = vmatpush.msra.mxu0 0.0
        %443 = vmatpush.msra.mxu0 0.0
        %444 = vmatpush.msra.mxu0 0.0
        %445 = vmatpush.msra.mxu0 0.0
        %446 = vmatpush.msra.mxu0 0.0
        %447 = vmatpush.msra.mxu0 0.0
        %448 = vmatpush.msra.mxu0 0.0
        %449 = vmatpush.msra.mxu0 0.0
        %450 = vmatpush.msra.mxu0 0.0
        %451 = vmatpush.msra.mxu0 0.0
        %452 = vmatpush.msra.mxu0 0.0
        %453 = vmatpush.msra.mxu0 0.0
        %454 = vmatpush.msra.mxu0 0.0
        %455 = vmatpush.msra.mxu0 0.0
        %456 = vmatpush.msra.mxu0 0.0
        %457 = vmatpush.msra.mxu0 %v438
        %458 = vmatmul.f32.gmra.mxu0 %v436
        %v459 = vpop.f32.mrf.mxu0
        %v460 = vadd.f32 %v409, %v459
        %461 = vdwg.mxu0
        %462 = vmatpush.msra.mxu0 0.0
        %463 = vmatpush.msra.mxu0 0.0
        %464 = vmatpush.msra.mxu0 0.0
        %465 = vmatpush.msra.mxu0 0.0
        %466 = vmatpush.msra.mxu0 0.0
        %467 = vmatpush.msra.mxu0 0.0
        %468 = vmatpush.msra.mxu0 0.0
        %469 = vmatpush.msra.mxu0 0.0
        %470 = vmatpush.msra.mxu0 0.0
        %471 = vmatpush.msra.mxu0 0.0
        %472 = vmatpush.msra.mxu0 0.0
        %473 = vmatpush.msra.mxu0 0.0
        %474 = vmatpush.msra.mxu0 0.0
        %475 = vmatpush.msra.mxu0 0.0
        %476 = vmatpush.msra.mxu0 0.0
        %477 = vmatpush.msra.mxu0 %v440
        %478 = vmatmul.f32.gmra.mxu0 %v436
        %v479 = vpop.f32.mrf.mxu0
        %v480 = vadd.f32 %v429, %v479
        %481 = vdwg.mxu0
        %482 = vst [vmem:[%s313] sm:$0xff] %v460
        %483 = vst [vmem:[%s313 + $0x8] sm:$0xff] %v480
        %s484 = sand.u32 %s185, 1
        %s485 = scalar_lea.sflag [#allocation4], %s484
        %s486 = sand.u32 %s185, 1
        %s487 = smul.addr %s486, 16
        %s488 = scalar_lea.vmem [#allocation5], %s487
        // Predicated region
        $region49: #{tpu_custom_call.1} parent=43 // pred_check
          %p489 = pneg %p195
        $region50: #{tpu_custom_call.1} parent=43 // pred_check_branch
          %491 = sbr.rel (%p489) target = $region52
        $region51: #{tpu_custom_call.1} parent=43 // pred_region
          %s492 = smul.u32 2, %s28
          %494 = vsyncadd %s485, 0
          %s495 = smul.addr %s27, 2
          %s496 = sadd.s32 %s492, %s495
          %s497 = smul.addr %s496, 8
          %s498 = scalar_lea.hbm %s6, %s497
          %s500 = sshll.u32 %s488, 4
          %s501 = int_to_ptr.vmem [resolvable:$true] %s500
          %s502 = sshll.u32 %s498, 4
          %s503 = int_to_ptr.hbm [resolvable:$true] %s502
          %505 = dma.vmem_to_hbm [thread:$0]  %s501, 256, %s503, %s485
        $region52: #{tpu_custom_call.1} parent=43 // pred_fallthru
          _
      $region44: #{tpu_custom_call.1} parent=5 // pred_fallthru
        _
      %p506 = scmp.le.s32.totalorder 2, %s18
      // Predicated region
      $region53: #{tpu_custom_call.1} parent=5 // pred_check
        %p507 = pneg %p506
      $region54: #{tpu_custom_call.1} parent=5 // pred_check_branch
        %509 = sbr.rel (%p507) target = $region56
      $region55: #{tpu_custom_call.1} parent=5 // pred_region
        %s510 = ssub.s32 %s18, 2
        // Predicated region
        $region57: #{tpu_custom_call.1} parent=55 // pred_check
          %p511 = pneg %p201
        $region58: #{tpu_custom_call.1} parent=55 // pred_check_branch
          %513 = sbr.rel (%p511) target = $region60
        $region59: #{tpu_custom_call.1} parent=55 // pred_region
          %s514 = sand.u32 %s186, 1
          %s515 = scalar_lea.sflag [#allocation4], %s514
          %s516 = sand.u32 %s186, 1
          %s517 = smul.addr %s516, 16
          %s518 = scalar_lea.vmem [#allocation5], %s517
          %520 = dma.done %s515, 256
        $region60: #{tpu_custom_call.1} parent=55 // pred_fallthru
          _
      $region56: #{tpu_custom_call.1} parent=5 // pred_fallthru
        _
    $region6: #{tpu_custom_call.1} parent=1 // loop_footer
      %s22 = sadd.s32 1, %s18
    $region7: #{tpu_custom_call.1} parent=1 // loop_footer_branch
      %17 = sbr.rel target = $region3
    $region8: #{tpu_custom_call.1} parent=1 // loop_exit
      _
    %521 = vsyncpa [#allocation3], 1
    %s522 = scalar_lea.sflag [#allocation3], 1
    %523 = vsyncpa %s522, 1
    %524 = vsyncpa [#allocation4], 1
    %s525 = scalar_lea.sflag [#allocation4], 1
    %526 = vsyncpa %s525, 1

</llo_original>
